<compile_context>
chip_gen: v6e
topology: v6e:2x2x1
jax: 0.10.0
libtpu: 0.0.40
codegen_flags: <defaults>
</compile_context>

<pallas_src>
import jax
import jax.numpy as jnp
import numpy as np
from jax.experimental import pallas as pl
from jax.experimental.pallas import tpu as pltpu


# ----------------------------------------------------------------------------
# Host-side helpers
# ----------------------------------------------------------------------------
def _round_up(x, m):
    return ((x + m - 1) // m) * m


def _choose_tile_m(m, target=1024, min_steps=2):
    """Row-tile size: multiple of 8, <= target, keeping >= min_steps grid steps
    (so both v7x TensorCores get work via the 'parallel' grid axis)."""
    tile = min(target, _round_up(m, 8))
    while tile > 8 and pl.cdiv(m, tile) < min_steps:
        tile = max(8, _round_up(tile // 2, 8))
    return tile


def fold_conv_bn(w, gamma, beta, mean, var, eps=1e-5):
    """Fold eval-mode BatchNorm into a 1x1 conv weight stored as (Cin, Cout).

    Returns (w_folded, bias) with bias shaped (1, Cout)."""
    scale = gamma / jnp.sqrt(var + eps)
    return w * scale[None, :], (beta - mean * scale)[None, :]


def _bilinear_matrix(in_size, out_size):
    """1-D resize matrix reproducing F.interpolate(mode='bilinear',
    align_corners=False) along one spatial axis.  Rows sum to 1."""
    scale = in_size / out_size
    i = np.arange(out_size, dtype=np.float64)
    src = (i + 0.5) * scale - 0.5
    src = np.maximum(src, 0.0)  # PyTorch clamps negative src for linear modes
    i0 = np.minimum(np.floor(src).astype(np.int64), in_size - 1)
    i1 = np.minimum(i0 + 1, in_size - 1)
    frac = src - i0
    m = np.zeros((out_size, in_size), dtype=np.float32)
    np.add.at(m, (np.arange(out_size), i0), (1.0 - frac).astype(np.float32))
    np.add.at(m, (np.arange(out_size), i1), frac.astype(np.float32))
    return jnp.asarray(m)


def _bilinear_resize_nhwc(x, out_hw):
    n, h, w, c = x.shape
    mh = _bilinear_matrix(h, out_hw[0])
    mw = _bilinear_matrix(w, out_hw[1])
    y = jnp.einsum("Hh,nhwc->nHwc", mh, x.astype(jnp.float32))
    y = jnp.einsum("Ww,nHwc->nHWc", mw, y)
    return y


# ----------------------------------------------------------------------------
# Fused Pallas kernel: skip conv + bias (+ resized up add) + ReLU
#                      (+ cross conv + bias + ReLU)
# ----------------------------------------------------------------------------
def _make_kernel(has_up, has_cross):
    def kernel(*refs):
        it = iter(refs)
        x_ref = next(it)
        w_skip_ref = next(it)
        b1_ref = next(it)
        up_ref = next(it) if has_up else None
        if has_cross:
            w_cross_ref = next(it)
            b5_ref = next(it)
        out_ref = next(it)
        cross_ref = next(it) if has_cross else None

        # u_skip (1x1 conv) + folded bn1 bias.
        acc = jnp.dot(x_ref[...], w_skip_ref[...],
                      preferred_element_type=jnp.float32)
        acc = acc + b1_ref[...]                       # (1, C) broadcast

        if has_up:
            # up branch was already conv+bn'd (on the low-res tensor) and
            # resized on the host; just add it here.
            acc = acc + up_ref[...].astype(jnp.float32)

        out = jnp.maximum(acc, 0.0)
        out_ref[...] = out.astype(out_ref.dtype)

        if has_cross:
            c = jnp.dot(out.astype(w_cross_ref.dtype), w_cross_ref[...],
                        preferred_element_type=jnp.float32)
            c = c + b5_ref[...]
            cross_ref[...] = jnp.maximum(c, 0.0).astype(cross_ref.dtype)

    return kernel


def upsample_unit_forward(params, x_nhwc, up_nhwc, ind, scale,
                          tile_m=None, compute_dtype=jnp.bfloat16,
                          out_dtype=jnp.float32):
    """Pallas implementation of Upsample_unit.forward (eval-mode BN).

    x_nhwc : (N, H, W, in_planes)   NHWC
    up_nhwc: (N, h, w, chl_num)     NHWC (only used if ind > 0)
    Returns (out, cross): out (N, H, W, chl_num) and cross (N, H, W, 64) or None.
    """
    has_up = ind > 0
    has_cross = ind == 3

    N, H, W, Cin = x_nhwc.shape
    C = params["w_skip"].shape[1]
    assert tuple(scale) == (H, W), "interpolate target must match x spatial size"

    M = N * H * W
    if tile_m is None:
        tile_m = _choose_tile_m(M)
    grid = (pl.cdiv(M, tile_m),)

    x2d = x_nhwc.reshape(M, Cin).astype(compute_dtype)
    inputs = [x2d,
              params["w_skip"].astype(compute_dtype),
              params["b_skip"].astype(jnp.float32)]
    in_specs = [
        pl.BlockSpec((tile_m, Cin), lambda i: (i, 0)),
        pl.BlockSpec((Cin, C), lambda i: (0, 0)),
        pl.BlockSpec((1, C), lambda i: (0, 0)),
    ]

    if has_up:
        # up_conv + bn2 on the LOW-RES tensor, then bilinear resize.  Exact
        # reorder: bilinear rows sum to 1 and everything up to the add is
        # affine (ReLU stays after the add, inside the kernel).
        u_small = jnp.einsum(
            "nhwc,cd->nhwd",
            up_nhwc.astype(compute_dtype),
            params["w_up"].astype(compute_dtype),
            preferred_element_type=jnp.float32) + params["b_up"]
        u2d = _bilinear_resize_nhwc(u_small, scale).reshape(M, C)
        u2d = u2d.astype(compute_dtype)
        inputs.append(u2d)
        in_specs.append(pl.BlockSpec((tile_m, C), lambda i: (i, 0)))

    Cx = None
    if has_cross:
        Cx = params["w_cross"].shape[1]
        inputs += [params["w_cross"].astype(compute_dtype),
                   params["b_cross"].astype(jnp.float32)]
        in_specs += [pl.BlockSpec((C, Cx), lambda i: (0, 0)),
                     pl.BlockSpec((1, Cx), lambda i: (0, 0))]

    out_shapes = [jax.ShapeDtypeStruct((M, C), out_dtype)]
    out_specs = [pl.BlockSpec((tile_m, C), lambda i: (i, 0))]
    if has_cross:
        out_shapes.append(jax.ShapeDtypeStruct((M, Cx), out_dtype))
        out_specs.append(pl.BlockSpec((tile_m, Cx), lambda i: (i, 0)))

    flops = 2 * M * Cin * C + (2 * M * C * Cx if has_cross else 0)
    bytes_accessed = sum(int(np.prod(a.shape)) * np.dtype(a.dtype).itemsize
                         for a in inputs)
    bytes_accessed += sum(int(np.prod(s.shape)) * np.dtype(s.dtype).itemsize
                          for s in out_shapes)

    fn = pl.pallas_call(
        _make_kernel(has_up, has_cross),
        grid=grid,
        in_specs=in_specs,
        out_specs=tuple(out_specs) if has_cross else out_specs[0],
        out_shape=tuple(out_shapes) if has_cross else out_shapes[0],
        compiler_params=pltpu.CompilerParams(
            dimension_semantics=("parallel",)),
        cost_estimate=pl.CostEstimate(
            flops=int(flops), transcendentals=0,
            bytes_accessed=int(bytes_accessed)),
    )
    res = fn(*inputs)
    results = res if isinstance(res, (tuple, list)) else (res,)

    out = results[0].reshape(N, H, W, C)
    cross = results[1].reshape(N, H, W, Cx) if has_cross else None
    return out, cross


# ----------------------------------------------------------------------------
# Plain-JAX f32 reference (faithful to the PyTorch op order), for checking.
# ----------------------------------------------------------------------------
def reference_forward(params, x_nhwc, up_nhwc, ind, scale):
    acc = jnp.einsum("nhwc,cd->nhwd", x_nhwc, params["w_skip"]) + params["b_skip"]
    if ind > 0:
        up_r = _bilinear_resize_nhwc(up_nhwc.astype(jnp.float32), scale)
        acc = acc + jnp.einsum("nhwc,cd->nhwd", up_r, params["w_up"]) + params["b_up"]
    out = jnp.maximum(acc, 0.0)
    cross = None
    if ind == 3:
        cross = jnp.maximum(
            jnp.einsum("nhwc,cd->nhwd", out, params["w_cross"]) + params["b_cross"],
            0.0)
    return out, cross


if __name__ == "__main__":
    key = jax.random.PRNGKey(0)
    keys = jax.random.split(key, 5)

    in_planes, chl_num, cross_chl = 8, 32, 64
    N, H, W = 2, 16, 16          # spatial size of x (and the target `scale`)
    h, w = 8, 8                  # spatial size of up_x (gets upsampled 2x)
    scale = (H, W)

    def make_conv_bn(k, cin, cout):
        ks = jax.random.split(k, 5)
        wconv = 0.1 * jax.random.normal(ks[0], (cin, cout), jnp.float32)
        gamma = 1.0 + 0.1 * jax.random.normal(ks[1], (cout,), jnp.float32)
        beta = 0.1 * jax.random.normal(ks[2], (cout,), jnp.float32)
        mean = 0.1 * jax.random.normal(ks[3], (cout,), jnp.float32)
        var = jnp.abs(jax.random.normal(ks[4], (cout,), jnp.float32)) + 0.5
        return fold_conv_bn(wconv, gamma, beta, mean, var)

    w_skip, b_skip = make_conv_bn(keys[0], in_planes, chl_num)
    w_up, b_up = make_conv_bn(keys[1], chl_num, chl_num)
    w_cross, b_cross = make_conv_bn(keys[2], chl_num, cross_chl)
    params = dict(w_skip=w_skip, b_skip=b_skip, w_up=w_up, b_up=b_up,
                  w_cross=w_cross, b_cross=b_cross)

    # NHWC inputs (PyTorch NCHW x of shape (2, 8, 16, 16) <-> this (2, 16, 16, 8)).
    x = jax.random.normal(keys[3], (N, H, W, in_planes), jnp.float32)
    up_x = jax.random.normal(keys[4], (N, h, w, chl_num), jnp.float32)

    ref_out, ref_cross = reference_forward(params, x, up_x, 3, scale)

    # 1) ind == 3 (all branches), bf16 streaming fast path.
    out, cross = upsample_unit_forward(params, x, up_x, 3, scale)
    jax.block_until_ready(out)
    jax.block_until_ready(cross)
    assert np.allclose(np.asarray(out), np.asarray(ref_out), rtol=5e-2, atol=5e-2)
    assert np.allclose(np.asarray(cross), np.asarray(ref_cross), rtol=5e-2, atol=5e-2)

    # 2) ind == 3 with f32 compute (also validates the conv-before-resize reorder).
    out32, cross32 = upsample_unit_forward(params, x, up_x, 3, scale,
                                           compute_dtype=jnp.float32)
    jax.block_until_ready(out32)
    assert np.allclose(np.asarray(out32), np.asarray(ref_out), rtol=1e-2, atol=1e-2)
    assert np.allclose(np.asarray(cross32), np.asarray(ref_cross), rtol=1e-2, atol=1e-2)

    # 3) ind == 0 (skip-only branch, single kernel output).
    out0, cross0 = upsample_unit_forward(params, x, None, 0, scale,
                                         compute_dtype=jnp.float32)
    jax.block_until_ready(out0)
    ref0, _ = reference_forward(params, x, None, 0, scale)
    assert cross0 is None
    assert np.allclose(np.asarray(out0), np.asarray(ref0), rtol=1e-2, atol=1e-2)

    print("KERNEL_OK")
</pallas_src>

<mosaic_0001>
module attributes {stable_mosaic.version = 11 : i64} {
  func.func @kernel(%arg0: i32, %arg1: memref<256x8xbf16, #tpu.memory_space<vmem>>, %arg2: memref<8x32xbf16, #tpu.memory_space<vmem>>, %arg3: memref<1x32xf32, #tpu.memory_space<vmem>>, %arg4: memref<256x32xbf16, #tpu.memory_space<vmem>>, %arg5: memref<32x64xbf16, #tpu.memory_space<vmem>>, %arg6: memref<1x64xf32, #tpu.memory_space<vmem>>, %arg7: memref<256x32xf32, #tpu.memory_space<vmem>>, %arg8: memref<256x64xf32, #tpu.memory_space<vmem>>) attributes {dimension_semantics = [#tpu.dimension_semantics<parallel>], iteration_bounds = array<i64: 2>, scalar_prefetch = 0 : i64, scratch_operands = 0 : i64, tpu.core_type = #tpu.core_type<tc>, window_params = [{transform_indices = @transform_0, window_bounds = array<i64: 256, 8>}, {pipeline_mode = #tpu.pipeline_mode<synchronous>, transform_indices = @transform_1, window_bounds = array<i64: 8, 32>}, {pipeline_mode = #tpu.pipeline_mode<synchronous>, transform_indices = @transform_2, window_bounds = array<i64: 1, 32>}, {transform_indices = @transform_3, window_bounds = array<i64: 256, 32>}, {pipeline_mode = #tpu.pipeline_mode<synchronous>, transform_indices = @transform_4, window_bounds = array<i64: 32, 64>}, {pipeline_mode = #tpu.pipeline_mode<synchronous>, transform_indices = @transform_5, window_bounds = array<i64: 1, 64>}, {transform_indices = @transform_6, window_bounds = array<i64: 256, 32>}, {transform_indices = @transform_7, window_bounds = array<i64: 256, 64>}]} {
    %c0 = arith.constant 0 : index
    %c0_0 = arith.constant 0 : index
    %0 = vector.load %arg1[%c0, %c0_0] : memref<256x8xbf16, #tpu.memory_space<vmem>>, vector<256x8xbf16>
    %c0_1 = arith.constant 0 : index
    %c0_2 = arith.constant 0 : index
    %1 = vector.load %arg2[%c0_1, %c0_2] : memref<8x32xbf16, #tpu.memory_space<vmem>>, vector<8x32xbf16>
    %cst = arith.constant dense<0.000000e+00> : vector<256x32xf32>
    %2 = tpu.matmul %0, %1, %cst {dimension_numbers = #tpu.dot_dimension_numbers<[1], [0], [0], [1], [0, 0, 1, 1], [], []>} : vector<256x8xbf16>, vector<8x32xbf16>, vector<256x32xf32> -> vector<256x32xf32>
    %c0_3 = arith.constant 0 : index
    %c0_4 = arith.constant 0 : index
    %3 = vector.load %arg3[%c0_3, %c0_4] : memref<1x32xf32, #tpu.memory_space<vmem>>, vector<1x32xf32>
    %4 = vector.broadcast %3 : vector<1x32xf32> to vector<256x32xf32>
    %5 = arith.addf %2, %4 : vector<256x32xf32>
    %c0_5 = arith.constant 0 : index
    %c0_6 = arith.constant 0 : index
    %6 = vector.load %arg4[%c0_5, %c0_6] : memref<256x32xbf16, #tpu.memory_space<vmem>>, vector<256x32xbf16>
    %7 = arith.extf %6 : vector<256x32xbf16> to vector<256x32xf32>
    %8 = arith.addf %5, %7 : vector<256x32xf32>
    %cst_7 = arith.constant 0.000000e+00 : f32
    %9 = vector.broadcast %cst_7 : f32 to vector<256x32xf32>
    %10 = arith.maximumf %8, %9 : vector<256x32xf32>
    %c0_8 = arith.constant 0 : index
    %c0_9 = arith.constant 0 : index
    %11 = vector.load %arg7[%c0_8, %c0_9] : memref<256x32xf32, #tpu.memory_space<vmem>>, vector<256x32xf32>
    tpu.vector_store %arg7[%c0_8, %c0_9], %10 {strides = array<i32>} : memref<256x32xf32, #tpu.memory_space<vmem>>, vector<256x32xf32>,
    %12 = arith.truncf %10 : vector<256x32xf32> to vector<256x32xbf16>
    %c0_10 = arith.constant 0 : index
    %c0_11 = arith.constant 0 : index
    %13 = vector.load %arg5[%c0_10, %c0_11] : memref<32x64xbf16, #tpu.memory_space<vmem>>, vector<32x64xbf16>
    %cst_12 = arith.constant dense<0.000000e+00> : vector<256x64xf32>
    %14 = tpu.matmul %12, %13, %cst_12 {dimension_numbers = #tpu.dot_dimension_numbers<[1], [0], [0], [1], [0, 0, 1, 1], [], []>} : vector<256x32xbf16>, vector<32x64xbf16>, vector<256x64xf32> -> vector<256x64xf32>
    %c0_13 = arith.constant 0 : index
    %c0_14 = arith.constant 0 : index
    %15 = vector.load %arg6[%c0_13, %c0_14] : memref<1x64xf32, #tpu.memory_space<vmem>>, vector<1x64xf32>
    %16 = vector.broadcast %15 : vector<1x64xf32> to vector<256x64xf32>
    %17 = arith.addf %14, %16 : vector<256x64xf32>
    %cst_15 = arith.constant 0.000000e+00 : f32
    %18 = vector.broadcast %cst_15 : f32 to vector<256x64xf32>
    %19 = arith.maximumf %17, %18 : vector<256x64xf32>
    %c0_16 = arith.constant 0 : index
    %c0_17 = arith.constant 0 : index
    %20 = vector.load %arg8[%c0_16, %c0_17] : memref<256x64xf32, #tpu.memory_space<vmem>>, vector<256x64xf32>
    tpu.vector_store %arg8[%c0_16, %c0_17], %19 {strides = array<i32>} : memref<256x64xf32, #tpu.memory_space<vmem>>, vector<256x64xf32>,
    return
  }
  func.func @transform_0(%arg0: i32) -> (i32, i32) {
    %c0_i32 = arith.constant 0 : i32
    %c0_i32_0 = arith.constant 0 : i32
    return %arg0, %c0_i32 : i32, i32
  }
  func.func @transform_1(%arg0: i32) -> (i32, i32) {
    %c0_i32 = arith.constant 0 : i32
    %c0_i32_0 = arith.constant 0 : i32
    %c0_i32_1 = arith.constant 0 : i32
    return %c0_i32, %c0_i32_0 : i32, i32
  }
  func.func @transform_2(%arg0: i32) -> (i32, i32) {
    %c0_i32 = arith.constant 0 : i32
    %c0_i32_0 = arith.constant 0 : i32
    %c0_i32_1 = arith.constant 0 : i32
    return %c0_i32, %c0_i32_0 : i32, i32
  }
  func.func @transform_3(%arg0: i32) -> (i32, i32) {
    %c0_i32 = arith.constant 0 : i32
    %c0_i32_0 = arith.constant 0 : i32
    return %arg0, %c0_i32 : i32, i32
  }
  func.func @transform_4(%arg0: i32) -> (i32, i32) {
    %c0_i32 = arith.constant 0 : i32
    %c0_i32_0 = arith.constant 0 : i32
    %c0_i32_1 = arith.constant 0 : i32
    return %c0_i32, %c0_i32_0 : i32, i32
  }
  func.func @transform_5(%arg0: i32) -> (i32, i32) {
    %c0_i32 = arith.constant 0 : i32
    %c0_i32_0 = arith.constant 0 : i32
    %c0_i32_1 = arith.constant 0 : i32
    return %c0_i32, %c0_i32_0 : i32, i32
  }
  func.func @transform_6(%arg0: i32) -> (i32, i32) {
    %c0_i32 = arith.constant 0 : i32
    %c0_i32_0 = arith.constant 0 : i32
    return %arg0, %c0_i32 : i32, i32
  }
  func.func @transform_7(%arg0: i32) -> (i32, i32) {
    %c0_i32 = arith.constant 0 : i32
    %c0_i32_0 = arith.constant 0 : i32
    return %arg0, %c0_i32 : i32, i32
  }
}

</mosaic_0001>

<llo_original>
// kernel: tpu_custom_call.1
$region0: #{tpu_custom_call.1}
  #allocation0 [shape = 'u32[]', space=smem, size = 0x4, offset = 0x4, fixed_abs, tag = 'smem constant byte address 0x4 - core index']
  #allocation1 [shape = 'u32[144,128]{1,0:T(1,128)}', space=vmem, size = 0x12000, scoped, tag = 'internal scratch']
  %s0 = inlined_call_operand.vmem [shape: bf16[512,8], index: 0, kind: input, shape index: {}]
  %s1 = inlined_call_operand.vmem [shape: bf16[8,32], index: 1, kind: input, shape index: {}]
  %s2 = inlined_call_operand.vmem [shape: f32[1,32], index: 2, kind: input, shape index: {}]
  %s3 = inlined_call_operand.vmem [shape: bf16[512,32], index: 3, kind: input, shape index: {}]
  %s4 = inlined_call_operand.vmem [shape: bf16[32,64], index: 4, kind: input, shape index: {}]
  %s5 = inlined_call_operand.vmem [shape: f32[1,64], index: 5, kind: input, shape index: {}]
  %s6 = inlined_call_operand.vmem [shape: f32[512,32], index: 6, kind: output, shape index: {0}]
  %s7 = inlined_call_operand.vmem [shape: f32[512,64], index: 7, kind: output, shape index: {1}]
  %8 = xla_tuple %s6, %s7
  %s9 = sld [smem:[#allocation0]]
  $region65: #{tpu_custom_call.1} parent=0
    _
  %s11 = ssub.s32 1, %s9
  %s12 = scalar_select 0, %s11, %s9
  loop: start=0, step=1, limit=4
  $region2: #{tpu_custom_call.1} parent=0 // loop_pre_header
    _
  $region3: #{tpu_custom_call.1} parent=0 // loop_header
    %s14 = sphi 0, %s18
    %p15 = scmp.ge.s32.totalorder %s14, 4
    %s24 = sphi 0, %s26
    %s27 = sphi 0, %s24
    %s28 = sphi 0, %s27
    %s44 = sphi 0, %s28
    %s48 = sphi 0, %s48
    %s50 = sphi 0, %s48
    %s51 = sphi 0, %s50
    %s65 = sphi 0, %s51
    %s69 = sphi 0, %s69
    %s71 = sphi 0, %s69
    %s72 = sphi 0, %s71
    %s86 = sphi 0, %s72
    %s92 = sphi 0, %s94
    %s95 = sphi 0, %s92
    %s96 = sphi 0, %s95
    %s112 = sphi 0, %s96
    %s116 = sphi 0, %s116
    %s118 = sphi 0, %s116
    %s119 = sphi 0, %s118
    %s133 = sphi 0, %s119
    %s137 = sphi 0, %s137
    %s139 = sphi 0, %s137
    %s140 = sphi 0, %s139
    %s154 = sphi 0, %s140
    %s160 = sphi 0, %s162
    %s163 = sphi 0, %s160
    %s164 = sphi 0, %s163
    %s180 = sphi 0, %s164
    %s186 = sphi 0, %s188
    %s189 = sphi 0, %s186
    %s190 = sphi 0, %s189
    %s206 = sphi 0, %s190
  $region4: #{tpu_custom_call.1} parent=0 // loop_header_branch
    %17 = sbr.rel (%p15) target = $region8
  $region5: #{tpu_custom_call.1} parent=0 // loop_body
    %s19 = ssub.s32 %s14, 1
    %s20 = ssub.s32 %s14, 2
    %s21 = sadd.s32 %s14, 1
    %s22 = ssub.s32 %s14, %s21
    %p23 = scmp.eq.s32.totalorder %s22, 0
    %s25 = sadd.s32 %s24, 1
    %s26 = scalar_select %p23, %s24, %s25
    %p29 = pneg %p23
    %p30 = scmp.eq.s32.totalorder %s14, 1
    %p31 = por %p29, %p30
    %p32 = scmp.ne.s32.totalorder %s24, %s27
    %p33 = scmp.eq.s32.totalorder %s14, 0
    %p34 = por %p32, %p33
    %p35 = scmp.ne.s32.totalorder %s24, %s27
    %p36 = scmp.eq.s32.totalorder %s19, 1
    %p37 = por %p35, %p36
    %p38 = scmp.ne.s32.totalorder %s27, %s28
    %p39 = scmp.eq.s32.totalorder %s19, 0
    %p40 = por %p38, %p39
    %p41 = scmp.ne.s32.totalorder %s27, %s28
    %p42 = scmp.eq.s32.totalorder %s20, 1
    %p43 = por %p41, %p42
    %p45 = scmp.ne.s32.totalorder %s28, %s44
    %p46 = scmp.eq.s32.totalorder %s20, 0
    %p47 = por %p45, %p46
    %s49 = sadd.s32 %s48, 1
    %p52 = scmp.eq.s32.totalorder %s14, 1
    %p53 = scmp.ne.s32.totalorder %s48, %s50
    %p54 = scmp.eq.s32.totalorder %s14, 0
    %p55 = por %p53, %p54
    %p56 = scmp.ne.s32.totalorder %s48, %s50
    %p57 = scmp.eq.s32.totalorder %s19, 1
    %p58 = por %p56, %p57
    %p59 = scmp.ne.s32.totalorder %s50, %s51
    %p60 = scmp.eq.s32.totalorder %s19, 0
    %p61 = por %p59, %p60
    %p62 = scmp.ne.s32.totalorder %s50, %s51
    %p63 = scmp.eq.s32.totalorder %s20, 1
    %p64 = por %p62, %p63
    %p66 = scmp.ne.s32.totalorder %s51, %s65
    %p67 = scmp.eq.s32.totalorder %s20, 0
    %p68 = por %p66, %p67
    %s70 = sadd.s32 %s69, 1
    %p73 = scmp.eq.s32.totalorder %s14, 1
    %p74 = scmp.ne.s32.totalorder %s69, %s71
    %p75 = scmp.eq.s32.totalorder %s14, 0
    %p76 = por %p74, %p75
    %p77 = scmp.ne.s32.totalorder %s69, %s71
    %p78 = scmp.eq.s32.totalorder %s19, 1
    %p79 = por %p77, %p78
    %p80 = scmp.ne.s32.totalorder %s71, %s72
    %p81 = scmp.eq.s32.totalorder %s19, 0
    %p82 = por %p80, %p81
    %p83 = scmp.ne.s32.totalorder %s71, %s72
    %p84 = scmp.eq.s32.totalorder %s20, 1
    %p85 = por %p83, %p84
    %p87 = scmp.ne.s32.totalorder %s72, %s86
    %p88 = scmp.eq.s32.totalorder %s20, 0
    %p89 = por %p87, %p88
    %s90 = ssub.s32 %s14, %s21
    %p91 = scmp.eq.s32.totalorder %s90, 0
    %s93 = sadd.s32 %s92, 1
    %s94 = scalar_select %p91, %s92, %s93
    %p97 = pneg %p91
    %p98 = scmp.eq.s32.totalorder %s14, 1
    %p99 = por %p97, %p98
    %p100 = scmp.ne.s32.totalorder %s92, %s95
    %p101 = scmp.eq.s32.totalorder %s14, 0
    %p102 = por %p100, %p101
    %p103 = scmp.ne.s32.totalorder %s92, %s95
    %p104 = scmp.eq.s32.totalorder %s19, 1
    %p105 = por %p103, %p104
    %p106 = scmp.ne.s32.totalorder %s95, %s96
    %p107 = scmp.eq.s32.totalorder %s19, 0
    %p108 = por %p106, %p107
    %p109 = scmp.ne.s32.totalorder %s95, %s96
    %p110 = scmp.eq.s32.totalorder %s20, 1
    %p111 = por %p109, %p110
    %p113 = scmp.ne.s32.totalorder %s96, %s112
    %p114 = scmp.eq.s32.totalorder %s20, 0
    %p115 = por %p113, %p114
    %s117 = sadd.s32 %s116, 1
    %p120 = scmp.eq.s32.totalorder %s14, 1
    %p121 = scmp.ne.s32.totalorder %s116, %s118
    %p122 = scmp.eq.s32.totalorder %s14, 0
    %p123 = por %p121, %p122
    %p124 = scmp.ne.s32.totalorder %s116, %s118
    %p125 = scmp.eq.s32.totalorder %s19, 1
    %p126 = por %p124, %p125
    %p127 = scmp.ne.s32.totalorder %s118, %s119
    %p128 = scmp.eq.s32.totalorder %s19, 0
    %p129 = por %p127, %p128
    %p130 = scmp.ne.s32.totalorder %s118, %s119
    %p131 = scmp.eq.s32.totalorder %s20, 1
    %p132 = por %p130, %p131
    %p134 = scmp.ne.s32.totalorder %s119, %s133
    %p135 = scmp.eq.s32.totalorder %s20, 0
    %p136 = por %p134, %p135
    %s138 = sadd.s32 %s137, 1
    %p141 = scmp.eq.s32.totalorder %s14, 1
    %p142 = scmp.ne.s32.totalorder %s137, %s139
    %p143 = scmp.eq.s32.totalorder %s14, 0
    %p144 = por %p142, %p143
    %p145 = scmp.ne.s32.totalorder %s137, %s139
    %p146 = scmp.eq.s32.totalorder %s19, 1
    %p147 = por %p145, %p146
    %p148 = scmp.ne.s32.totalorder %s139, %s140
    %p149 = scmp.eq.s32.totalorder %s19, 0
    %p150 = por %p148, %p149
    %p151 = scmp.ne.s32.totalorder %s139, %s140
    %p152 = scmp.eq.s32.totalorder %s20, 1
    %p153 = por %p151, %p152
    %p155 = scmp.ne.s32.totalorder %s140, %s154
    %p156 = scmp.eq.s32.totalorder %s20, 0
    %p157 = por %p155, %p156
    %s158 = ssub.s32 %s14, %s21
    %p159 = scmp.eq.s32.totalorder %s158, 0
    %s161 = sadd.s32 %s160, 1
    %s162 = scalar_select %p159, %s160, %s161
    %p165 = pneg %p159
    %p166 = scmp.eq.s32.totalorder %s14, 1
    %p167 = por %p165, %p166
    %p168 = scmp.ne.s32.totalorder %s160, %s163
    %p169 = scmp.eq.s32.totalorder %s14, 0
    %p170 = por %p168, %p169
    %p171 = scmp.ne.s32.totalorder %s160, %s163
    %p172 = scmp.eq.s32.totalorder %s19, 1
    %p173 = por %p171, %p172
    %p174 = scmp.ne.s32.totalorder %s163, %s164
    %p175 = scmp.eq.s32.totalorder %s19, 0
    %p176 = por %p174, %p175
    %p177 = scmp.ne.s32.totalorder %s163, %s164
    %p178 = scmp.eq.s32.totalorder %s20, 1
    %p179 = por %p177, %p178
    %p181 = scmp.ne.s32.totalorder %s164, %s180
    %p182 = scmp.eq.s32.totalorder %s20, 0
    %p183 = por %p181, %p182
    %s184 = ssub.s32 %s14, %s21
    %p185 = scmp.eq.s32.totalorder %s184, 0
    %s187 = sadd.s32 %s186, 1
    %s188 = scalar_select %p185, %s186, %s187
    %p191 = pneg %p185
    %p192 = scmp.eq.s32.totalorder %s14, 1
    %p193 = por %p191, %p192
    %p194 = scmp.ne.s32.totalorder %s186, %s189
    %p195 = scmp.eq.s32.totalorder %s14, 0
    %p196 = por %p194, %p195
    %p197 = scmp.ne.s32.totalorder %s186, %s189
    %p198 = scmp.eq.s32.totalorder %s19, 1
    %p199 = por %p197, %p198
    %p200 = scmp.ne.s32.totalorder %s189, %s190
    %p201 = scmp.eq.s32.totalorder %s19, 0
    %p202 = por %p200, %p201
    %p203 = scmp.ne.s32.totalorder %s189, %s190
    %p204 = scmp.eq.s32.totalorder %s20, 1
    %p205 = por %p203, %p204
    %p207 = scmp.ne.s32.totalorder %s190, %s206
    %p208 = scmp.eq.s32.totalorder %s20, 0
    %p209 = por %p207, %p208
    %p210 = scmp.le.s32.totalorder 1, %s14
    %p211 = scmp.lt.s32.totalorder %s14, 3
    %p212 = pnand %p210, %p211
    %p213 = pneg %p212
    // Predicated region
    $region9: #{tpu_custom_call.1} parent=5 // pred_check
      _
    $region10: #{tpu_custom_call.1} parent=5 // pred_check_branch
      %215 = sbr.rel (%p212) target = $region12
    $region11: #{tpu_custom_call.1} parent=5 // pred_region
      %s216 = ssub.s32 %s14, 1
      // Predicated region
      $region13: #{tpu_custom_call.1} parent=11 // pred_check
        %p217 = pneg %p61
      $region14: #{tpu_custom_call.1} parent=11 // pred_check_branch
        %219 = sbr.rel (%p217) target = $region16
      $region15: #{tpu_custom_call.1} parent=11 // pred_region
        _
      $region16: #{tpu_custom_call.1} parent=11 // pred_fallthru
        _
      // Predicated region
      $region17: #{tpu_custom_call.1} parent=11 // pred_check
        %p220 = pneg %p82
      $region18: #{tpu_custom_call.1} parent=11 // pred_check_branch
        %222 = sbr.rel (%p220) target = $region20
      $region19: #{tpu_custom_call.1} parent=11 // pred_region
        _
      $region20: #{tpu_custom_call.1} parent=11 // pred_fallthru
        _
      // Predicated region
      $region21: #{tpu_custom_call.1} parent=11 // pred_check
        %p223 = pneg %p129
      $region22: #{tpu_custom_call.1} parent=11 // pred_check_branch
        %225 = sbr.rel (%p223) target = $region24
      $region23: #{tpu_custom_call.1} parent=11 // pred_region
        _
      $region24: #{tpu_custom_call.1} parent=11 // pred_fallthru
        _
      // Predicated region
      $region25: #{tpu_custom_call.1} parent=11 // pred_check
        %p226 = pneg %p150
      $region26: #{tpu_custom_call.1} parent=11 // pred_check_branch
        %228 = sbr.rel (%p226) target = $region28
      $region27: #{tpu_custom_call.1} parent=11 // pred_region
        _
      $region28: #{tpu_custom_call.1} parent=11 // pred_fallthru
        _
    $region12: #{tpu_custom_call.1} parent=5 // pred_fallthru
      _
    %p229 = scmp.lt.s32.totalorder %s14, 2
    // Predicated region
    $region29: #{tpu_custom_call.1} parent=5 // pred_check
      %p230 = pneg %p229
    $region30: #{tpu_custom_call.1} parent=5 // pred_check_branch
      %232 = sbr.rel (%p230) target = $region32
    $region31: #{tpu_custom_call.1} parent=5 // pred_region
      // Predicated region
      $region33: #{tpu_custom_call.1} parent=31 // pred_check
        %p233 = pneg %p34
      $region34: #{tpu_custom_call.1} parent=31 // pred_check_branch
        %235 = sbr.rel (%p233) target = $region36
      $region35: #{tpu_custom_call.1} parent=31 // pred_region
        %s236 = smul.u32 32, %s14
        %p237 = scmp.lt.s32.totalorder %s236, 63
        %s238 = scalar_select %p237, %s236, 63
        %s239 = smul.addr %s238, 4
        %s240 = scalar_lea.vmem %s0, %s239
        %s241 = smul.u32 32, %s14
      $region36: #{tpu_custom_call.1} parent=31 // pred_fallthru
        _
      // Predicated region
      $region37: #{tpu_custom_call.1} parent=31 // pred_check
        %p242 = pneg %p102
      $region38: #{tpu_custom_call.1} parent=31 // pred_check_branch
        %244 = sbr.rel (%p242) target = $region40
      $region39: #{tpu_custom_call.1} parent=31 // pred_region
        %s245 = smul.u32 32, %s14
        %p246 = scmp.lt.s32.totalorder %s245, 63
        %s247 = scalar_select %p246, %s245, 63
        %s248 = smul.addr %s247, 4
        %s249 = scalar_lea.vmem %s3, %s248
        %s250 = smul.u32 32, %s14
      $region40: #{tpu_custom_call.1} parent=31 // pred_fallthru
        _
    $region32: #{tpu_custom_call.1} parent=5 // pred_fallthru
      _
    %p251 = scmp.le.s32.totalorder 1, %s14
    %p252 = scmp.lt.s32.totalorder %s14, 3
    %p253 = pnand %p251, %p252
    %p254 = pneg %p253
    // Predicated region
    $region41: #{tpu_custom_call.1} parent=5 // pred_check
      _
    $region42: #{tpu_custom_call.1} parent=5 // pred_check_branch
      %256 = sbr.rel (%p253) target = $region44
    $region43: #{tpu_custom_call.1} parent=5 // pred_region
      %s257 = ssub.s32 %s14, 1
      %s258 = smul.u32 32, %s19
      %p259 = scmp.lt.s32.totalorder %s258, 63
      %s260 = scalar_select %p259, %s258, 63
      %s261 = smul.addr %s260, 4
      %s262 = scalar_lea.vmem %s0, %s261
      %p263 = pneg %p40
      %p264 = pneg %p37
      %p265 = pneg %p61
      %p266 = pneg %p58
      %p267 = pneg %p82
      %p268 = pneg %p79
      %s269 = smul.u32 32, %s19
      %p270 = scmp.lt.s32.totalorder %s269, 63
      %s271 = scalar_select %p270, %s269, 63
      %s272 = smul.addr %s271, 4
      %s273 = scalar_lea.vmem %s3, %s272
      %p274 = pneg %p108
      %p275 = pneg %p105
      %p276 = pneg %p129
      %p277 = pneg %p126
      %p278 = pneg %p150
      %p279 = pneg %p147
      %p280 = pneg %p176
      %p281 = pneg %p173
      %s282 = smul.u32 32, %s19
      %p283 = scmp.lt.s32.totalorder %s282, 63
      %s284 = scalar_select %p283, %s282, 63
      %s285 = smul.addr %s284, 8
      %s286 = scalar_lea.vmem %s6, %s285
      %p287 = pneg %p202
      %p288 = pneg %p199
      %s289 = smul.u32 32, %s19
      %p290 = scmp.lt.s32.totalorder %s289, 63
      %s291 = scalar_select %p290, %s289, 63
      %s292 = smul.addr %s291, 8
      %s293 = scalar_lea.vmem %s7, %s292
      %s294 = smul.u32 32, %s19
      %p295 = scmp.lt.s32.totalorder %s294, 63
      %s296 = scalar_select %p295, %s294, 63
      %s297 = smul.addr %s296, 4
      %s298 = scalar_lea.vmem %s0, %s297
      %s299 = smul.u32 32, %s19
      %s300 = smul.u32 32, %s19
      %p301 = scmp.lt.s32.totalorder %s300, 63
      %s302 = scalar_select %p301, %s300, 63
      %s303 = smul.addr %s302, 4
      %s304 = scalar_lea.vmem %s3, %s303
      %s305 = smul.u32 32, %s19
      %s306 = smul.u32 32, %s19
      %p307 = scmp.lt.s32.totalorder %s306, 63
      %s308 = scalar_select %p307, %s306, 63
      %s309 = smul.addr %s308, 8
      %s310 = scalar_lea.vmem %s6, %s309
      %s311 = smul.u32 32, %s19
      %s312 = smul.u32 32, %s19
      %p313 = scmp.lt.s32.totalorder %s312, 63
      %s314 = scalar_select %p313, %s312, 63
      %s315 = smul.addr %s314, 8
      %s316 = scalar_lea.vmem %s7, %s315
      %s317 = smul.u32 32, %s19
      %v319 = vld [vmem:[%s298] sm:$0xf]
      %v320 = vld [vmem:[%s298 + $0x4] sm:$0xf]
      %v321 = vld [vmem:[%s298 + $0x8] sm:$0xf]
      %v322 = vld [vmem:[%s298 + $0xc] sm:$0xf]
      %v323 = vld [vmem:[%s298 + $0x10] sm:$0xf]
      %v324 = vld [vmem:[%s298 + $0x14] sm:$0xf]
      %v325 = vld [vmem:[%s298 + $0x18] sm:$0xf]
      %v326 = vld [vmem:[%s298 + $0x1c] sm:$0xf]
      %v327 = vld [vmem:[%s298 + $0x20] sm:$0xf]
      %v328 = vld [vmem:[%s298 + $0x24] sm:$0xf]
      %v329 = vld [vmem:[%s298 + $0x28] sm:$0xf]
      %v330 = vld [vmem:[%s298 + $0x2c] sm:$0xf]
      %v331 = vld [vmem:[%s298 + $0x30] sm:$0xf]
      %v332 = vld [vmem:[%s298 + $0x34] sm:$0xf]
      %v333 = vld [vmem:[%s298 + $0x38] sm:$0xf]
      %v334 = vld [vmem:[%s298 + $0x3c] sm:$0xf]
      %v335 = vld [vmem:[%s298 + $0x40] sm:$0xf]
      %v336 = vld [vmem:[%s298 + $0x44] sm:$0xf]
      %v337 = vld [vmem:[%s298 + $0x48] sm:$0xf]
      %v338 = vld [vmem:[%s298 + $0x4c] sm:$0xf]
      %v339 = vld [vmem:[%s298 + $0x50] sm:$0xf]
      %v340 = vld [vmem:[%s298 + $0x54] sm:$0xf]
      %v341 = vld [vmem:[%s298 + $0x58] sm:$0xf]
      %v342 = vld [vmem:[%s298 + $0x5c] sm:$0xf]
      %v343 = vld [vmem:[%s298 + $0x60] sm:$0xf]
      %v344 = vld [vmem:[%s298 + $0x64] sm:$0xf]
      %v345 = vld [vmem:[%s298 + $0x68] sm:$0xf]
      %v346 = vld [vmem:[%s298 + $0x6c] sm:$0xf]
      %v347 = vld [vmem:[%s298 + $0x70] sm:$0xf]
      %v348 = vld [vmem:[%s298 + $0x74] sm:$0xf]
      %v349 = vld [vmem:[%s298 + $0x78] sm:$0xf]
      %v350 = vld [vmem:[%s298 + $0x7c] sm:$0xf]
      %v351 = vld [vmem:[%s1] sm:$0xf]
      %v352 = vld [vmem:[%s2] sm:$0x1]
      %v354 = vlaneseq
      %v355 = vshrl.u32 %v354, 7
      %v356 = vsub.s32 0, %v355
      %v357 = vrot.slane %v352, %v356
      %v391 = vunpack.c.l.b16 %v319
      %v392 = vunpack.c.l.b16 %v320
      %v393 = vunpack.c.l.b16 %v321
      %v394 = vunpack.c.l.b16 %v322
      %v395 = vunpack.c.l.b16 %v323
      %v396 = vunpack.c.l.b16 %v324
      %v397 = vunpack.c.l.b16 %v325
      %v398 = vunpack.c.l.b16 %v326
      %v399 = vunpack.c.l.b16 %v327
      %v400 = vunpack.c.l.b16 %v328
      %v401 = vunpack.c.l.b16 %v329
      %v402 = vunpack.c.l.b16 %v330
      %v403 = vunpack.c.l.b16 %v331
      %v404 = vunpack.c.l.b16 %v332
      %v405 = vunpack.c.l.b16 %v333
      %v406 = vunpack.c.l.b16 %v334
      %v407 = vunpack.c.l.b16 %v335
      %v408 = vunpack.c.l.b16 %v336
      %v409 = vunpack.c.l.b16 %v337
      %v410 = vunpack.c.l.b16 %v338
      %v411 = vunpack.c.l.b16 %v339
      %v412 = vunpack.c.l.b16 %v340
      %v413 = vunpack.c.l.b16 %v341
      %v414 = vunpack.c.l.b16 %v342
      %v415 = vunpack.c.l.b16 %v343
      %v416 = vunpack.c.l.b16 %v344
      %v417 = vunpack.c.l.b16 %v345
      %v418 = vunpack.c.l.b16 %v346
      %v419 = vunpack.c.l.b16 %v347
      %v420 = vunpack.c.l.b16 %v348
      %v421 = vunpack.c.l.b16 %v349
      %v422 = vunpack.c.l.b16 %v350
      %v423 = vpack.c.b16 %v392, %v391
      %v424 = vpack.c.b16 %v394, %v393
      %v425 = vpack.c.b16 %v396, %v395
      %v426 = vpack.c.b16 %v398, %v397
      %v427 = vpack.c.b16 %v400, %v399
      %v428 = vpack.c.b16 %v402, %v401
      %v429 = vpack.c.b16 %v404, %v403
      %v430 = vpack.c.b16 %v406, %v405
      %v431 = vpack.c.b16 %v408, %v407
      %v432 = vpack.c.b16 %v410, %v409
      %v433 = vpack.c.b16 %v412, %v411
      %v434 = vpack.c.b16 %v414, %v413
      %v435 = vpack.c.b16 %v416, %v415
      %v436 = vpack.c.b16 %v418, %v417
      %v437 = vpack.c.b16 %v420, %v419
      %v438 = vpack.c.b16 %v422, %v421
      %vm439 = vcmask 64512
      %v441 = vsel %vm439, %v423, 0
      %v444 = vsel %vm439, %v424, 0
      %v447 = vsel %vm439, %v425, 0
      %v450 = vsel %vm439, %v426, 0
      %v453 = vsel %vm439, %v427, 0
      %v456 = vsel %vm439, %v428, 0
      %v459 = vsel %vm439, %v429, 0
      %v462 = vsel %vm439, %v430, 0
      %v465 = vsel %vm439, %v431, 0
      %v468 = vsel %vm439, %v432, 0
      %v471 = vsel %vm439, %v433, 0
      %v474 = vsel %vm439, %v434, 0
      %v477 = vsel %vm439, %v435, 0
      %v480 = vsel %vm439, %v436, 0
      %v483 = vsel %vm439, %v437, 0
      %v486 = vsel %vm439, %v438, 0
      %vm488 = vcmask 1043456
      %v490 = vsel %vm488, %v351, 0
      %492 = vmatprep.subr.bf16.mxu0 0
      %493 = vmatpush1.bf16.msra.mxu0 0
      %494 = vmatprep.subr.bf16.mxu0 0
      %495 = vmatpush1.bf16.msra.mxu0 0
      %496 = vmatprep.subr.bf16.mxu0 0
      %497 = vmatpush1.bf16.msra.mxu0 0
      %498 = vmatprep.subr.bf16.mxu0 0
      %499 = vmatpush1.bf16.msra.mxu0 0
      %500 = vmatprep.subr.bf16.mxu0 0
      %501 = vmatpush1.bf16.msra.mxu0 0
      %502 = vmatprep.subr.bf16.mxu0 0
      %503 = vmatpush1.bf16.msra.mxu0 0
      %504 = vmatprep.subr.bf16.mxu0 0
      %505 = vmatpush1.bf16.msra.mxu0 0
      %506 = vmatprep.subr.bf16.mxu0 0
      %507 = vmatpush1.bf16.msra.mxu0 %v490
      %508 = vmatprep.subr.bf16.mxu0 0
      %509 = vmatpush2.bf16.msra.mxu0 0
      %510 = vmatprep.subr.bf16.mxu0 0
      %511 = vmatpush2.bf16.msra.mxu0 0
      %512 = vmatprep.subr.bf16.mxu0 0
      %513 = vmatpush2.bf16.msra.mxu0 0
      %514 = vmatprep.subr.bf16.mxu0 0
      %515 = vmatpush2.bf16.msra.mxu0 0
      %516 = vmatprep.subr.bf16.mxu0 0
      %517 = vmatpush2.bf16.msra.mxu0 0
      %518 = vmatprep.subr.bf16.mxu0 0
      %519 = vmatpush2.bf16.msra.mxu0 0
      %520 = vmatprep.subr.bf16.mxu0 0
      %521 = vmatpush2.bf16.msra.mxu0 0
      %522 = vmatprep.subr.bf16.mxu0 0
      %523 = vmatpush2.bf16.msra.mxu0 0
      %524 = vmatprep.mubr.bf16.mxu0 0
      %525 = vmatmul.mubr.bf16.gmra.mxu0 %v441
      %v526 = vpop.f32.mrf.mxu0
      %v527 = vadd.f32 %v357, %v526
      %v528 = vpop.f32.mrf.mxu0
      %v529 = vpop.f32.mrf.mxu0
      %v530 = vadd.f32 %v357, %v529
      %v531 = vpop.f32.mrf.mxu0
      %532 = vmatprep.mubr.bf16.mxu0 0
      %533 = vmatmul.mubr.bf16.gmra.mxu0 %v444
      %v534 = vpop.f32.mrf.mxu0
      %v535 = vadd.f32 %v357, %v534
      %v536 = vpop.f32.mrf.mxu0
      %v537 = vpop.f32.mrf.mxu0
      %v538 = vadd.f32 %v357, %v537
      %v539 = vpop.f32.mrf.mxu0
      %540 = vmatprep.mubr.bf16.mxu0 0
      %541 = vmatmul.mubr.bf16.gmra.mxu0 %v447
      %v542 = vpop.f32.mrf.mxu0
      %v543 = vadd.f32 %v357, %v542
      %v544 = vpop.f32.mrf.mxu0
      %v545 = vpop.f32.mrf.mxu0
      %v546 = vadd.f32 %v357, %v545
      %v547 = vpop.f32.mrf.mxu0
      %548 = vmatprep.mubr.bf16.mxu0 0
      %549 = vmatmul.mubr.bf16.gmra.mxu0 %v450
      %v550 = vpop.f32.mrf.mxu0
      %v551 = vadd.f32 %v357, %v550
      %v552 = vpop.f32.mrf.mxu0
      %v553 = vpop.f32.mrf.mxu0
      %v554 = vadd.f32 %v357, %v553
      %v555 = vpop.f32.mrf.mxu0
      %556 = vmatprep.mubr.bf16.mxu0 0
      %557 = vmatmul.mubr.bf16.gmra.mxu0 %v453
      %v558 = vpop.f32.mrf.mxu0
      %v559 = vadd.f32 %v357, %v558
      %v560 = vpop.f32.mrf.mxu0
      %v561 = vpop.f32.mrf.mxu0
      %v562 = vadd.f32 %v357, %v561
      %v563 = vpop.f32.mrf.mxu0
      %564 = vmatprep.mubr.bf16.mxu0 0
      %565 = vmatmul.mubr.bf16.gmra.mxu0 %v456
      %v566 = vpop.f32.mrf.mxu0
      %v567 = vadd.f32 %v357, %v566
      %v568 = vpop.f32.mrf.mxu0
      %v569 = vpop.f32.mrf.mxu0
      %v570 = vadd.f32 %v357, %v569
      %v571 = vpop.f32.mrf.mxu0
      %572 = vmatprep.mubr.bf16.mxu0 0
      %573 = vmatmul.mubr.bf16.gmra.mxu0 %v459
      %v574 = vpop.f32.mrf.mxu0
      %v575 = vadd.f32 %v357, %v574
      %v576 = vpop.f32.mrf.mxu0
      %v577 = vpop.f32.mrf.mxu0
      %v578 = vadd.f32 %v357, %v577
      %v579 = vpop.f32.mrf.mxu0
      %580 = vmatprep.mubr.bf16.mxu0 0
      %581 = vmatmul.mubr.bf16.gmra.mxu0 %v462
      %v582 = vpop.f32.mrf.mxu0
      %v583 = vadd.f32 %v357, %v582
      %v584 = vpop.f32.mrf.mxu0
      %v585 = vpop.f32.mrf.mxu0
      %v586 = vadd.f32 %v357, %v585
      %v587 = vpop.f32.mrf.mxu0
      %588 = vmatprep.mubr.bf16.mxu0 0
      %589 = vmatmul.mubr.bf16.gmra.mxu0 %v465
      %v590 = vpop.f32.mrf.mxu0
      %v591 = vadd.f32 %v357, %v590
      %v592 = vpop.f32.mrf.mxu0
      %v593 = vpop.f32.mrf.mxu0
      %v594 = vadd.f32 %v357, %v593
      %v595 = vpop.f32.mrf.mxu0
      %596 = vmatprep.mubr.bf16.mxu0 0
      %597 = vmatmul.mubr.bf16.gmra.mxu0 %v468
      %v598 = vpop.f32.mrf.mxu0
      %v599 = vadd.f32 %v357, %v598
      %v600 = vpop.f32.mrf.mxu0
      %v601 = vpop.f32.mrf.mxu0
      %v602 = vadd.f32 %v357, %v601
      %v603 = vpop.f32.mrf.mxu0
      %604 = vmatprep.mubr.bf16.mxu0 0
      %605 = vmatmul.mubr.bf16.gmra.mxu0 %v471
      %v606 = vpop.f32.mrf.mxu0
      %v607 = vadd.f32 %v357, %v606
      %v608 = vpop.f32.mrf.mxu0
      %v609 = vpop.f32.mrf.mxu0
      %v610 = vadd.f32 %v357, %v609
      %v611 = vpop.f32.mrf.mxu0
      %612 = vmatprep.mubr.bf16.mxu0 0
      %613 = vmatmul.mubr.bf16.gmra.mxu0 %v474
      %v614 = vpop.f32.mrf.mxu0
      %v615 = vadd.f32 %v357, %v614
      %v616 = vpop.f32.mrf.mxu0
      %v617 = vpop.f32.mrf.mxu0
      %v618 = vadd.f32 %v357, %v617
      %v619 = vpop.f32.mrf.mxu0
      %620 = vmatprep.mubr.bf16.mxu0 0
      %621 = vmatmul.mubr.bf16.gmra.mxu0 %v477
      %v622 = vpop.f32.mrf.mxu0
      %v623 = vadd.f32 %v357, %v622
      %v624 = vpop.f32.mrf.mxu0
      %v625 = vpop.f32.mrf.mxu0
      %v626 = vadd.f32 %v357, %v625
      %v627 = vpop.f32.mrf.mxu0
      %628 = vmatprep.mubr.bf16.mxu0 0
      %629 = vmatmul.mubr.bf16.gmra.mxu0 %v480
      %v630 = vpop.f32.mrf.mxu0
      %v631 = vadd.f32 %v357, %v630
      %v632 = vpop.f32.mrf.mxu0
      %v633 = vpop.f32.mrf.mxu0
      %v634 = vadd.f32 %v357, %v633
      %v635 = vpop.f32.mrf.mxu0
      %636 = vmatprep.mubr.bf16.mxu0 0
      %637 = vmatmul.mubr.bf16.gmra.mxu0 %v483
      %v638 = vpop.f32.mrf.mxu0
      %v639 = vadd.f32 %v357, %v638
      %v640 = vpop.f32.mrf.mxu0
      %v641 = vpop.f32.mrf.mxu0
      %v642 = vadd.f32 %v357, %v641
      %v643 = vpop.f32.mrf.mxu0
      %644 = vmatprep.mubr.bf16.mxu0 0
      %645 = vmatmul.mubr.bf16.gmra.mxu0 %v486
      %v646 = vpop.f32.mrf.mxu0
      %v647 = vadd.f32 %v357, %v646
      %v648 = vpop.f32.mrf.mxu0
      %v649 = vpop.f32.mrf.mxu0
      %v650 = vadd.f32 %v357, %v649
      %v651 = vpop.f32.mrf.mxu0
      %652 = vdwg.mxu0
      %v653 = vld [vmem:[%s304] sm:$0xf]
      %v654 = vld [vmem:[%s304 + $0x4] sm:$0xf]
      %v655 = vld [vmem:[%s304 + $0x8] sm:$0xf]
      %v656 = vld [vmem:[%s304 + $0xc] sm:$0xf]
      %v657 = vld [vmem:[%s304 + $0x10] sm:$0xf]
      %v658 = vld [vmem:[%s304 + $0x14] sm:$0xf]
      %v659 = vld [vmem:[%s304 + $0x18] sm:$0xf]
      %v660 = vld [vmem:[%s304 + $0x1c] sm:$0xf]
      %v661 = vld [vmem:[%s304 + $0x20] sm:$0xf]
      %v662 = vld [vmem:[%s304 + $0x24] sm:$0xf]
      %v663 = vld [vmem:[%s304 + $0x28] sm:$0xf]
      %v664 = vld [vmem:[%s304 + $0x2c] sm:$0xf]
      %v665 = vld [vmem:[%s304 + $0x30] sm:$0xf]
      %v666 = vld [vmem:[%s304 + $0x34] sm:$0xf]
      %v667 = vld [vmem:[%s304 + $0x38] sm:$0xf]
      %v668 = vld [vmem:[%s304 + $0x3c] sm:$0xf]
      %v669 = vld [vmem:[%s304 + $0x40] sm:$0xf]
      %v670 = vld [vmem:[%s304 + $0x44] sm:$0xf]
      %v671 = vld [vmem:[%s304 + $0x48] sm:$0xf]
      %v672 = vld [vmem:[%s304 + $0x4c] sm:$0xf]
      %v673 = vld [vmem:[%s304 + $0x50] sm:$0xf]
      %v674 = vld [vmem:[%s304 + $0x54] sm:$0xf]
      %v675 = vld [vmem:[%s304 + $0x58] sm:$0xf]
      %v676 = vld [vmem:[%s304 + $0x5c] sm:$0xf]
      %v677 = vld [vmem:[%s304 + $0x60] sm:$0xf]
      %v678 = vld [vmem:[%s304 + $0x64] sm:$0xf]
      %v679 = vld [vmem:[%s304 + $0x68] sm:$0xf]
      %v680 = vld [vmem:[%s304 + $0x6c] sm:$0xf]
      %v681 = vld [vmem:[%s304 + $0x70] sm:$0xf]
      %v682 = vld [vmem:[%s304 + $0x74] sm:$0xf]
      %v683 = vld [vmem:[%s304 + $0x78] sm:$0xf]
      %v684 = vld [vmem:[%s304 + $0x7c] sm:$0xf]
      %v685 = vunpack.c.l.bf16 %v653
      %v686 = vunpack.c.l.bf16 %v654
      %v687 = vunpack.c.l.bf16 %v655
      %v688 = vunpack.c.l.bf16 %v656
      %v689 = vunpack.c.l.bf16 %v657
      %v690 = vunpack.c.l.bf16 %v658
      %v691 = vunpack.c.l.bf16 %v659
      %v692 = vunpack.c.l.bf16 %v660
      %v693 = vunpack.c.l.bf16 %v661
      %v694 = vunpack.c.l.bf16 %v662
      %v695 = vunpack.c.l.bf16 %v663
      %v696 = vunpack.c.l.bf16 %v664
      %v697 = vunpack.c.l.bf16 %v665
      %v698 = vunpack.c.l.bf16 %v666
      %v699 = vunpack.c.l.bf16 %v667
      %v700 = vunpack.c.l.bf16 %v668
      %v701 = vunpack.c.l.bf16 %v669
      %v702 = vunpack.c.l.bf16 %v670
      %v703 = vunpack.c.l.bf16 %v671
      %v704 = vunpack.c.l.bf16 %v672
      %v705 = vunpack.c.l.bf16 %v673
      %v706 = vunpack.c.l.bf16 %v674
      %v707 = vunpack.c.l.bf16 %v675
      %v708 = vunpack.c.l.bf16 %v676
      %v709 = vunpack.c.l.bf16 %v677
      %v710 = vunpack.c.l.bf16 %v678
      %v711 = vunpack.c.l.bf16 %v679
      %v712 = vunpack.c.l.bf16 %v680
      %v713 = vunpack.c.l.bf16 %v681
      %v714 = vunpack.c.l.bf16 %v682
      %v715 = vunpack.c.l.bf16 %v683
      %v716 = vunpack.c.l.bf16 %v684
      %v717 = vadd.f32 %v527, %v685
      %v718 = vadd.f32 %v530, %v686
      %v719 = vadd.f32 %v535, %v687
      %v720 = vadd.f32 %v538, %v688
      %v721 = vadd.f32 %v543, %v689
      %v722 = vadd.f32 %v546, %v690
      %v723 = vadd.f32 %v551, %v691
      %v724 = vadd.f32 %v554, %v692
      %v725 = vadd.f32 %v559, %v693
      %v726 = vadd.f32 %v562, %v694
      %v727 = vadd.f32 %v567, %v695
      %v728 = vadd.f32 %v570, %v696
      %v729 = vadd.f32 %v575, %v697
      %v730 = vadd.f32 %v578, %v698
      %v731 = vadd.f32 %v583, %v699
      %v732 = vadd.f32 %v586, %v700
      %v733 = vadd.f32 %v591, %v701
      %v734 = vadd.f32 %v594, %v702
      %v735 = vadd.f32 %v599, %v703
      %v736 = vadd.f32 %v602, %v704
      %v737 = vadd.f32 %v607, %v705
      %v738 = vadd.f32 %v610, %v706
      %v739 = vadd.f32 %v615, %v707
      %v740 = vadd.f32 %v618, %v708
      %v741 = vadd.f32 %v623, %v709
      %v742 = vadd.f32 %v626, %v710
      %v743 = vadd.f32 %v631, %v711
      %v744 = vadd.f32 %v634, %v712
      %v745 = vadd.f32 %v639, %v713
      %v746 = vadd.f32 %v642, %v714
      %v747 = vadd.f32 %v647, %v715
      %v748 = vadd.f32 %v650, %v716
      %v749 = vmax.f32 %v717, 0.0
      %v750 = vmax.f32 %v718, 0.0
      %v751 = vmax.f32 %v719, 0.0
      %v752 = vmax.f32 %v720, 0.0
      %v753 = vmax.f32 %v721, 0.0
      %v754 = vmax.f32 %v722, 0.0
      %v755 = vmax.f32 %v723, 0.0
      %v756 = vmax.f32 %v724, 0.0
      %v757 = vmax.f32 %v725, 0.0
      %v758 = vmax.f32 %v726, 0.0
      %v759 = vmax.f32 %v727, 0.0
      %v760 = vmax.f32 %v728, 0.0
      %v761 = vmax.f32 %v729, 0.0
      %v762 = vmax.f32 %v730, 0.0
      %v763 = vmax.f32 %v731, 0.0
      %v764 = vmax.f32 %v732, 0.0
      %v765 = vmax.f32 %v733, 0.0
      %v766 = vmax.f32 %v734, 0.0
      %v767 = vmax.f32 %v735, 0.0
      %v768 = vmax.f32 %v736, 0.0
      %v769 = vmax.f32 %v737, 0.0
      %v770 = vmax.f32 %v738, 0.0
      %v771 = vmax.f32 %v739, 0.0
      %v772 = vmax.f32 %v740, 0.0
      %v773 = vmax.f32 %v741, 0.0
      %v774 = vmax.f32 %v742, 0.0
      %v775 = vmax.f32 %v743, 0.0
      %v776 = vmax.f32 %v744, 0.0
      %v777 = vmax.f32 %v745, 0.0
      %v778 = vmax.f32 %v746, 0.0
      %v779 = vmax.f32 %v747, 0.0
      %v780 = vmax.f32 %v748, 0.0
      %vm781 = vcmask 261120
      %782 = vst.msk [vmem:[%s310] sm:$0xff] %vm781, %v749
      %783 = vst.msk [vmem:[%s310 + $0x8] sm:$0xff] %vm781, %v750
      %784 = vst.msk [vmem:[%s310 + $0x10] sm:$0xff] %vm781, %v751
      %785 = vst.msk [vmem:[%s310 + $0x18] sm:$0xff] %vm781, %v752
      %786 = vst.msk [vmem:[%s310 + $0x20] sm:$0xff] %vm781, %v753
      %787 = vst.msk [vmem:[%s310 + $0x28] sm:$0xff] %vm781, %v754
      %788 = vst.msk [vmem:[%s310 + $0x30] sm:$0xff] %vm781, %v755
      %789 = vst.msk [vmem:[%s310 + $0x38] sm:$0xff] %vm781, %v756
      %790 = vst.msk [vmem:[%s310 + $0x40] sm:$0xff] %vm781, %v757
      %791 = vst.msk [vmem:[%s310 + $0x48] sm:$0xff] %vm781, %v758
      %792 = vst.msk [vmem:[%s310 + $0x50] sm:$0xff] %vm781, %v759
      %793 = vst.msk [vmem:[%s310 + $0x58] sm:$0xff] %vm781, %v760
      %794 = vst.msk [vmem:[%s310 + $0x60] sm:$0xff] %vm781, %v761
      %795 = vst.msk [vmem:[%s310 + $0x68] sm:$0xff] %vm781, %v762
      %796 = vst.msk [vmem:[%s310 + $0x70] sm:$0xff] %vm781, %v763
      %797 = vst.msk [vmem:[%s310 + $0x78] sm:$0xff] %vm781, %v764
      %798 = vst.msk [vmem:[%s310 + $0x80] sm:$0xff] %vm781, %v765
      %799 = vst.msk [vmem:[%s310 + $0x88] sm:$0xff] %vm781, %v766
      %800 = vst.msk [vmem:[%s310 + $0x90] sm:$0xff] %vm781, %v767
      %801 = vst.msk [vmem:[%s310 + $0x98] sm:$0xff] %vm781, %v768
      %802 = vst.msk [vmem:[%s310 + $0xa0] sm:$0xff] %vm781, %v769
      %803 = vst.msk [vmem:[%s310 + $0xa8] sm:$0xff] %vm781, %v770
      %804 = vst.msk [vmem:[%s310 + $0xb0] sm:$0xff] %vm781, %v771
      %805 = vst.msk [vmem:[%s310 + $0xb8] sm:$0xff] %vm781, %v772
      %806 = vst.msk [vmem:[%s310 + $0xc0] sm:$0xff] %vm781, %v773
      %807 = vst.msk [vmem:[%s310 + $0xc8] sm:$0xff] %vm781, %v774
      %808 = vst.msk [vmem:[%s310 + $0xd0] sm:$0xff] %vm781, %v775
      %809 = vst.msk [vmem:[%s310 + $0xd8] sm:$0xff] %vm781, %v776
      %810 = vst.msk [vmem:[%s310 + $0xe0] sm:$0xff] %vm781, %v777
      %811 = vst.msk [vmem:[%s310 + $0xe8] sm:$0xff] %vm781, %v778
      %812 = vst.msk [vmem:[%s310 + $0xf0] sm:$0xff] %vm781, %v779
      %813 = vst.msk [vmem:[%s310 + $0xf8] sm:$0xff] %vm781, %v780
      %v814 = vpack.c.bf16 %v750, %v749
      %v815 = vpack.c.bf16 %v752, %v751
      %v816 = vpack.c.bf16 %v754, %v753
      %v817 = vpack.c.bf16 %v756, %v755
      %v818 = vpack.c.bf16 %v758, %v757
      %v819 = vpack.c.bf16 %v760, %v759
      %v820 = vpack.c.bf16 %v762, %v761
      %v821 = vpack.c.bf16 %v764, %v763
      %v822 = vpack.c.bf16 %v766, %v765
      %v823 = vpack.c.bf16 %v768, %v767
      %v824 = vpack.c.bf16 %v770, %v769
      %v825 = vpack.c.bf16 %v772, %v771
      %v826 = vpack.c.bf16 %v774, %v773
      %v827 = vpack.c.bf16 %v776, %v775
      %v828 = vpack.c.bf16 %v778, %v777
      %v829 = vpack.c.bf16 %v780, %v779
      %v830 = vld [vmem:[%s4] sm:$0xf]
      %v831 = vld [vmem:[%s4 + $0x4] sm:$0xf]
      %v832 = vld [vmem:[%s4 + $0x8] sm:$0xf]
      %v833 = vld [vmem:[%s4 + $0xc] sm:$0xf]
      %v834 = vld [vmem:[%s5] sm:$0x1]
      %v836 = vlaneseq
      %v837 = vshrl.u32 %v836, 7
      %v838 = vsub.s32 0, %v837
      %v839 = vrot.slane %v834, %v838
      %v845 = vunpack.c.l.b16 %v830
      %v846 = vunpack.c.l.b16 %v831
      %v847 = vunpack.c.l.b16 %v832
      %v848 = vunpack.c.l.b16 %v833
      %v849 = vpack.c.b16 %v846, %v845
      %v850 = vpack.c.b16 %v848, %v847
      %v854 = vsel %vm781, %v814, 0
      %v857 = vsel %vm781, %v815, 0
      %v860 = vsel %vm781, %v816, 0
      %v863 = vsel %vm781, %v817, 0
      %v866 = vsel %vm781, %v818, 0
      %v869 = vsel %vm781, %v819, 0
      %v872 = vsel %vm781, %v820, 0
      %v875 = vsel %vm781, %v821, 0
      %v878 = vsel %vm781, %v822, 0
      %v881 = vsel %vm781, %v823, 0
      %v884 = vsel %vm781, %v824, 0
      %v887 = vsel %vm781, %v825, 0
      %v890 = vsel %vm781, %v826, 0
      %v893 = vsel %vm781, %v827, 0
      %v896 = vsel %vm781, %v828, 0
      %v899 = vsel %vm781, %v829, 0
      %901 = vmatprep.subr.bf16.mxu0 0
      %902 = vmatpush1.bf16.msra.mxu0 0
      %903 = vmatprep.subr.bf16.mxu0 0
      %904 = vmatpush1.bf16.msra.mxu0 0
      %905 = vmatprep.subr.bf16.mxu0 0
      %906 = vmatpush1.bf16.msra.mxu0 0
      %907 = vmatprep.subr.bf16.mxu0 0
      %908 = vmatpush1.bf16.msra.mxu0 0
      %909 = vmatprep.subr.bf16.mxu0 0
      %910 = vmatpush1.bf16.msra.mxu0 0
      %911 = vmatprep.subr.bf16.mxu0 0
      %912 = vmatpush1.bf16.msra.mxu0 0
      %913 = vmatprep.subr.bf16.mxu0 0
      %914 = vmatpush1.bf16.msra.mxu0 %v850
      %915 = vmatprep.subr.bf16.mxu0 0
      %916 = vmatpush1.bf16.msra.mxu0 %v849
      %917 = vmatprep.subr.bf16.mxu0 0
      %918 = vmatpush2.bf16.msra.mxu0 0
      %919 = vmatprep.subr.bf16.mxu0 0
      %920 = vmatpush2.bf16.msra.mxu0 0
      %921 = vmatprep.subr.bf16.mxu0 0
      %922 = vmatpush2.bf16.msra.mxu0 0
      %923 = vmatprep.subr.bf16.mxu0 0
      %924 = vmatpush2.bf16.msra.mxu0 0
      %925 = vmatprep.subr.bf16.mxu0 0
      %926 = vmatpush2.bf16.msra.mxu0 0
      %927 = vmatprep.subr.bf16.mxu0 0
      %928 = vmatpush2.bf16.msra.mxu0 0
      %929 = vmatprep.subr.bf16.mxu0 0
      %930 = vmatpush2.bf16.msra.mxu0 0
      %931 = vmatprep.subr.bf16.mxu0 0
      %932 = vmatpush2.bf16.msra.mxu0 0
      %933 = vmatprep.mubr.bf16.mxu0 0
      %934 = vmatmul.mubr.bf16.gmra.mxu0 %v854
      %v935 = vpop.f32.mrf.mxu0
      %v936 = vadd.f32 %v839, %v935
      %v937 = vpop.f32.mrf.mxu0
      %v938 = vpop.f32.mrf.mxu0
      %v939 = vadd.f32 %v839, %v938
      %v940 = vpop.f32.mrf.mxu0
      %941 = vmatprep.mubr.bf16.mxu0 0
      %942 = vmatmul.mubr.bf16.gmra.mxu0 %v857
      %v943 = vpop.f32.mrf.mxu0
      %v944 = vadd.f32 %v839, %v943
      %v945 = vpop.f32.mrf.mxu0
      %v946 = vpop.f32.mrf.mxu0
      %v947 = vadd.f32 %v839, %v946
      %v948 = vpop.f32.mrf.mxu0
      %949 = vmatprep.mubr.bf16.mxu0 0
      %950 = vmatmul.mubr.bf16.gmra.mxu0 %v860
      %v951 = vpop.f32.mrf.mxu0
      %v952 = vadd.f32 %v839, %v951
      %v953 = vpop.f32.mrf.mxu0
      %v954 = vpop.f32.mrf.mxu0
      %v955 = vadd.f32 %v839, %v954
      %v956 = vpop.f32.mrf.mxu0
      %957 = vmatprep.mubr.bf16.mxu0 0
      %958 = vmatmul.mubr.bf16.gmra.mxu0 %v863
      %v959 = vpop.f32.mrf.mxu0
      %v960 = vadd.f32 %v839, %v959
      %v961 = vpop.f32.mrf.mxu0
      %v962 = vpop.f32.mrf.mxu0
      %v963 = vadd.f32 %v839, %v962
      %v964 = vpop.f32.mrf.mxu0
      %965 = vmatprep.mubr.bf16.mxu0 0
      %966 = vmatmul.mubr.bf16.gmra.mxu0 %v866
      %v967 = vpop.f32.mrf.mxu0
      %v968 = vadd.f32 %v839, %v967
      %v969 = vpop.f32.mrf.mxu0
      %v970 = vpop.f32.mrf.mxu0
      %v971 = vadd.f32 %v839, %v970
      %v972 = vpop.f32.mrf.mxu0
      %973 = vmatprep.mubr.bf16.mxu0 0
      %974 = vmatmul.mubr.bf16.gmra.mxu0 %v869
      %v975 = vpop.f32.mrf.mxu0
      %v976 = vadd.f32 %v839, %v975
      %v977 = vpop.f32.mrf.mxu0
      %v978 = vpop.f32.mrf.mxu0
      %v979 = vadd.f32 %v839, %v978
      %v980 = vpop.f32.mrf.mxu0
      %981 = vmatprep.mubr.bf16.mxu0 0
      %982 = vmatmul.mubr.bf16.gmra.mxu0 %v872
      %v983 = vpop.f32.mrf.mxu0
      %v984 = vadd.f32 %v839, %v983
      %v985 = vpop.f32.mrf.mxu0
      %v986 = vpop.f32.mrf.mxu0
      %v987 = vadd.f32 %v839, %v986
      %v988 = vpop.f32.mrf.mxu0
      %989 = vmatprep.mubr.bf16.mxu0 0
      %990 = vmatmul.mubr.bf16.gmra.mxu0 %v875
      %v991 = vpop.f32.mrf.mxu0
      %v992 = vadd.f32 %v839, %v991
      %v993 = vpop.f32.mrf.mxu0
      %v994 = vpop.f32.mrf.mxu0
      %v995 = vadd.f32 %v839, %v994
      %v996 = vpop.f32.mrf.mxu0
      %997 = vmatprep.mubr.bf16.mxu0 0
      %998 = vmatmul.mubr.bf16.gmra.mxu0 %v878
      %v999 = vpop.f32.mrf.mxu0
      %v1000 = vadd.f32 %v839, %v999
      %v1001 = vpop.f32.mrf.mxu0
      %v1002 = vpop.f32.mrf.mxu0
      %v1003 = vadd.f32 %v839, %v1002
      %v1004 = vpop.f32.mrf.mxu0
      %1005 = vmatprep.mubr.bf16.mxu0 0
      %1006 = vmatmul.mubr.bf16.gmra.mxu0 %v881
      %v1007 = vpop.f32.mrf.mxu0
      %v1008 = vadd.f32 %v839, %v1007
      %v1009 = vpop.f32.mrf.mxu0
      %v1010 = vpop.f32.mrf.mxu0
      %v1011 = vadd.f32 %v839, %v1010
      %v1012 = vpop.f32.mrf.mxu0
      %1013 = vmatprep.mubr.bf16.mxu0 0
      %1014 = vmatmul.mubr.bf16.gmra.mxu0 %v884
      %v1015 = vpop.f32.mrf.mxu0
      %v1016 = vadd.f32 %v839, %v1015
      %v1017 = vpop.f32.mrf.mxu0
      %v1018 = vpop.f32.mrf.mxu0
      %v1019 = vadd.f32 %v839, %v1018
      %v1020 = vpop.f32.mrf.mxu0
      %1021 = vmatprep.mubr.bf16.mxu0 0
      %1022 = vmatmul.mubr.bf16.gmra.mxu0 %v887
      %v1023 = vpop.f32.mrf.mxu0
      %v1024 = vadd.f32 %v839, %v1023
      %v1025 = vpop.f32.mrf.mxu0
      %v1026 = vpop.f32.mrf.mxu0
      %v1027 = vadd.f32 %v839, %v1026
      %v1028 = vpop.f32.mrf.mxu0
      %1029 = vmatprep.mubr.bf16.mxu0 0
      %1030 = vmatmul.mubr.bf16.gmra.mxu0 %v890
      %v1031 = vpop.f32.mrf.mxu0
      %v1032 = vadd.f32 %v839, %v1031
      %v1033 = vpop.f32.mrf.mxu0
      %v1034 = vpop.f32.mrf.mxu0
      %v1035 = vadd.f32 %v839, %v1034
      %v1036 = vpop.f32.mrf.mxu0
      %1037 = vmatprep.mubr.bf16.mxu0 0
      %1038 = vmatmul.mubr.bf16.gmra.mxu0 %v893
      %v1039 = vpop.f32.mrf.mxu0
      %v1040 = vadd.f32 %v839, %v1039
      %v1041 = vpop.f32.mrf.mxu0
      %v1042 = vpop.f32.mrf.mxu0
      %v1043 = vadd.f32 %v839, %v1042
      %v1044 = vpop.f32.mrf.mxu0
      %1045 = vmatprep.mubr.bf16.mxu0 0
      %1046 = vmatmul.mubr.bf16.gmra.mxu0 %v896
      %v1047 = vpop.f32.mrf.mxu0
      %v1048 = vadd.f32 %v839, %v1047
      %v1049 = vpop.f32.mrf.mxu0
      %v1050 = vpop.f32.mrf.mxu0
      %v1051 = vadd.f32 %v839, %v1050
      %v1052 = vpop.f32.mrf.mxu0
      %1053 = vmatprep.mubr.bf16.mxu0 0
      %1054 = vmatmul.mubr.bf16.gmra.mxu0 %v899
      %v1055 = vpop.f32.mrf.mxu0
      %v1056 = vadd.f32 %v839, %v1055
      %v1057 = vpop.f32.mrf.mxu0
      %v1058 = vpop.f32.mrf.mxu0
      %v1059 = vadd.f32 %v839, %v1058
      %v1060 = vpop.f32.mrf.mxu0
      %1061 = vdwg.mxu0
      %v1062 = vmax.f32 %v936, 0.0
      %v1063 = vmax.f32 %v939, 0.0
      %v1064 = vmax.f32 %v944, 0.0
      %v1065 = vmax.f32 %v947, 0.0
      %v1066 = vmax.f32 %v952, 0.0
      %v1067 = vmax.f32 %v955, 0.0
      %v1068 = vmax.f32 %v960, 0.0
      %v1069 = vmax.f32 %v963, 0.0
      %v1070 = vmax.f32 %v968, 0.0
      %v1071 = vmax.f32 %v971, 0.0
      %v1072 = vmax.f32 %v976, 0.0
      %v1073 = vmax.f32 %v979, 0.0
      %v1074 = vmax.f32 %v984, 0.0
      %v1075 = vmax.f32 %v987, 0.0
      %v1076 = vmax.f32 %v992, 0.0
      %v1077 = vmax.f32 %v995, 0.0
      %v1078 = vmax.f32 %v1000, 0.0
      %v1079 = vmax.f32 %v1003, 0.0
      %v1080 = vmax.f32 %v1008, 0.0
      %v1081 = vmax.f32 %v1011, 0.0
      %v1082 = vmax.f32 %v1016, 0.0
      %v1083 = vmax.f32 %v1019, 0.0
      %v1084 = vmax.f32 %v1024, 0.0
      %v1085 = vmax.f32 %v1027, 0.0
      %v1086 = vmax.f32 %v1032, 0.0
      %v1087 = vmax.f32 %v1035, 0.0
      %v1088 = vmax.f32 %v1040, 0.0
      %v1089 = vmax.f32 %v1043, 0.0
      %v1090 = vmax.f32 %v1048, 0.0
      %v1091 = vmax.f32 %v1051, 0.0
      %v1092 = vmax.f32 %v1056, 0.0
      %v1093 = vmax.f32 %v1059, 0.0
      %vm1094 = vcmask 523264
      %1095 = vst.msk [vmem:[%s316] sm:$0xff] %vm1094, %v1062
      %1096 = vst.msk [vmem:[%s316 + $0x8] sm:$0xff] %vm1094, %v1063
      %1097 = vst.msk [vmem:[%s316 + $0x10] sm:$0xff] %vm1094, %v1064
      %1098 = vst.msk [vmem:[%s316 + $0x18] sm:$0xff] %vm1094, %v1065
      %1099 = vst.msk [vmem:[%s316 + $0x20] sm:$0xff] %vm1094, %v1066
      %1100 = vst.msk [vmem:[%s316 + $0x28] sm:$0xff] %vm1094, %v1067
      %1101 = vst.msk [vmem:[%s316 + $0x30] sm:$0xff] %vm1094, %v1068
      %1102 = vst.msk [vmem:[%s316 + $0x38] sm:$0xff] %vm1094, %v1069
      %1103 = vst.msk [vmem:[%s316 + $0x40] sm:$0xff] %vm1094, %v1070
      %1104 = vst.msk [vmem:[%s316 + $0x48] sm:$0xff] %vm1094, %v1071
      %1105 = vst.msk [vmem:[%s316 + $0x50] sm:$0xff] %vm1094, %v1072
      %1106 = vst.msk [vmem:[%s316 + $0x58] sm:$0xff] %vm1094, %v1073
      %1107 = vst.msk [vmem:[%s316 + $0x60] sm:$0xff] %vm1094, %v1074
      %1108 = vst.msk [vmem:[%s316 + $0x68] sm:$0xff] %vm1094, %v1075
      %1109 = vst.msk [vmem:[%s316 + $0x70] sm:$0xff] %vm1094, %v1076
      %1110 = vst.msk [vmem:[%s316 + $0x78] sm:$0xff] %vm1094, %v1077
      %1111 = vst.msk [vmem:[%s316 + $0x80] sm:$0xff] %vm1094, %v1078
      %1112 = vst.msk [vmem:[%s316 + $0x88] sm:$0xff] %vm1094, %v1079
      %1113 = vst.msk [vmem:[%s316 + $0x90] sm:$0xff] %vm1094, %v1080
      %1114 = vst.msk [vmem:[%s316 + $0x98] sm:$0xff] %vm1094, %v1081
      %1115 = vst.msk [vmem:[%s316 + $0xa0] sm:$0xff] %vm1094, %v1082
      %1116 = vst.msk [vmem:[%s316 + $0xa8] sm:$0xff] %vm1094, %v1083
      %1117 = vst.msk [vmem:[%s316 + $0xb0] sm:$0xff] %vm1094, %v1084
      %1118 = vst.msk [vmem:[%s316 + $0xb8] sm:$0xff] %vm1094, %v1085
      %1119 = vst.msk [vmem:[%s316 + $0xc0] sm:$0xff] %vm1094, %v1086
      %1120 = vst.msk [vmem:[%s316 + $0xc8] sm:$0xff] %vm1094, %v1087
      %1121 = vst.msk [vmem:[%s316 + $0xd0] sm:$0xff] %vm1094, %v1088
      %1122 = vst.msk [vmem:[%s316 + $0xd8] sm:$0xff] %vm1094, %v1089
      %1123 = vst.msk [vmem:[%s316 + $0xe0] sm:$0xff] %vm1094, %v1090
      %1124 = vst.msk [vmem:[%s316 + $0xe8] sm:$0xff] %vm1094, %v1091
      %1125 = vst.msk [vmem:[%s316 + $0xf0] sm:$0xff] %vm1094, %v1092
      %1126 = vst.msk [vmem:[%s316 + $0xf8] sm:$0xff] %vm1094, %v1093
      %s1127 = smul.u32 32, %s19
      %p1128 = scmp.lt.s32.totalorder %s1127, 63
      %s1129 = scalar_select %p1128, %s1127, 63
      %s1130 = smul.addr %s1129, 8
      %s1131 = scalar_lea.vmem %s6, %s1130
      %s1132 = smul.u32 32, %s19
      %p1133 = scmp.lt.s32.totalorder %s1132, 63
      %s1134 = scalar_select %p1133, %s1132, 63
      %s1135 = smul.addr %s1134, 8
      %s1136 = scalar_lea.vmem %s7, %s1135
      // Predicated region
      $region45: #{tpu_custom_call.1} parent=43 // pred_check
        %p1137 = pneg %p173
      $region46: #{tpu_custom_call.1} parent=43 // pred_check_branch
        %1139 = sbr.rel (%p1137) target = $region48
      $region47: #{tpu_custom_call.1} parent=43 // pred_region
        %s1140 = smul.u32 32, %s19
      $region48: #{tpu_custom_call.1} parent=43 // pred_fallthru
        _
      // Predicated region
      $region49: #{tpu_custom_call.1} parent=43 // pred_check
        %p1141 = pneg %p199
      $region50: #{tpu_custom_call.1} parent=43 // pred_check_branch
        %1143 = sbr.rel (%p1141) target = $region52
      $region51: #{tpu_custom_call.1} parent=43 // pred_region
        %s1144 = smul.u32 32, %s19
      $region52: #{tpu_custom_call.1} parent=43 // pred_fallthru
        _
    $region44: #{tpu_custom_call.1} parent=5 // pred_fallthru
      _
    %p1145 = scmp.le.s32.totalorder 2, %s14
    // Predicated region
    $region53: #{tpu_custom_call.1} parent=5 // pred_check
      %p1146 = pneg %p1145
    $region54: #{tpu_custom_call.1} parent=5 // pred_check_branch
      %1148 = sbr.rel (%p1146) target = $region56
    $region55: #{tpu_custom_call.1} parent=5 // pred_region
      %s1149 = ssub.s32 %s14, 2
      // Predicated region
      $region57: #{tpu_custom_call.1} parent=55 // pred_check
        %p1150 = pneg %p179
      $region58: #{tpu_custom_call.1} parent=55 // pred_check_branch
        %1152 = sbr.rel (%p1150) target = $region60
      $region59: #{tpu_custom_call.1} parent=55 // pred_region
        %s1153 = smul.u32 32, %s20
        %p1154 = scmp.lt.s32.totalorder %s1153, 63
        %s1155 = scalar_select %p1154, %s1153, 63
        %s1156 = smul.addr %s1155, 8
        %s1157 = scalar_lea.vmem %s6, %s1156
      $region60: #{tpu_custom_call.1} parent=55 // pred_fallthru
        _
      // Predicated region
      $region61: #{tpu_custom_call.1} parent=55 // pred_check
        %p1158 = pneg %p205
      $region62: #{tpu_custom_call.1} parent=55 // pred_check_branch
        %1160 = sbr.rel (%p1158) target = $region64
      $region63: #{tpu_custom_call.1} parent=55 // pred_region
        %s1161 = smul.u32 32, %s20
        %p1162 = scmp.lt.s32.totalorder %s1161, 63
        %s1163 = scalar_select %p1162, %s1161, 63
        %s1164 = smul.addr %s1163, 8
        %s1165 = scalar_lea.vmem %s7, %s1164
      $region64: #{tpu_custom_call.1} parent=55 // pred_fallthru
        _
    $region56: #{tpu_custom_call.1} parent=5 // pred_fallthru
      _
  $region6: #{tpu_custom_call.1} parent=0 // loop_footer
    %s18 = sadd.s32 1, %s14
  $region7: #{tpu_custom_call.1} parent=0 // loop_footer_branch
    %13 = sbr.rel target = $region3
  $region8: #{tpu_custom_call.1} parent=0 // loop_exit
    _

</llo_original>
